<compile_context>
chip_gen: v7x
topology: tpu7x:2x2x1
jax: 0.10.0
libtpu: 0.0.40
codegen_flags: <defaults>
</compile_context>

<pallas_src>
import jax
import jax.numpy as jnp
from jax.experimental import pallas as pl
from jax.experimental.pallas import tpu as pltpu


def _last_layer_kernel(x_ref, scale1_ref, w_ref, beff_ref, o_ref):
    # x_ref:      (tT, H)
    # scale1_ref: (1, H)   = 1 + scale          (per batch, resident)
    # w_ref:      (H, O)   = W^T                (resident, native/MXU dtype)
    # beff_ref:   (1, O)   = shift @ W^T + bias (per batch, f32, resident)
    # o_ref:      (tT, O)
    x = x_ref[...].astype(jnp.float32)                      # (tT, H)

    # Single-pass LayerNorm stats over the last dim (eps=1e-6, no affine,
    # biased variance like torch). var = E[x^2] - E[x]^2 avoids keeping a
    # separate (tT, H) centered temporary live across the matmul.
    mean = jnp.mean(x, axis=-1, keepdims=True)               # (tT, 1)
    mean_sq = jnp.mean(x * x, axis=-1, keepdims=True)        # (tT, 1)
    var = jnp.maximum(mean_sq - mean * mean, 0.0)
    inv = jax.lax.rsqrt(var + 1e-6)                          # (tT, 1)

    # Modulation (shift already folded into b_eff):
    #   mod = (1 + scale) * ((x - mean) * inv)
    scale1 = scale1_ref[...].astype(jnp.float32)             # (1, H)
    mod = (x - mean) * (inv * scale1)                        # (tT, H) f32

    # Linear: mod @ W^T + b_eff. Feed the MXU in the weight's dtype,
    # accumulate in f32.
    w = w_ref[...]                                           # (H, O)
    y = jnp.dot(mod.astype(w.dtype), w, preferred_element_type=jnp.float32)
    o_ref[...] = (y + beff_ref[...].astype(jnp.float32)).astype(o_ref.dtype)


def _vmem_limit_bytes():
    """Generation-dependent VMEM limit (v5e/v6e: 128 MiB physical, v7x: 64 MiB/TC)."""
    try:
        cap = int(pltpu.get_tpu_info().vmem_capacity_bytes)
    except Exception:
        return 48 * 1024 * 1024                      # safe everywhere
    if cap >= 100 * 1024 * 1024:
        return 100 * 1024 * 1024                     # v5e / v6e: use most of 128 MiB
    return min(48 * 1024 * 1024, (cap * 3) // 4)     # v7x: keep scratch headroom


def _pick_block_t(T, H, O, x_itemsize, vmem_limit):
    """Largest token tile whose per-step working set fits the VMEM budget."""
    budget = (vmem_limit * 3) // 4                   # headroom for resident W/scale/beff
    for cand in (1024, 768, 512, 384, 256, 128, 64, 32, 16, 8):
        # 2x double-buffered x tile + ~2 live (tT,H) f32 temporaries
        # + 2x double-buffered output tile.
        need = cand * H * (2 * x_itemsize + 2 * 4) + 2 * cand * O * x_itemsize
        if need <= budget:
            return cand
    return 8


def last_layer_forward(x, vec, weight, bias, *, block_t=None, mxu_dtype=None):
    """x: (B, T, H); vec: (2, B, 1, H); weight: (O, H) torch-style; bias: (O,)."""
    B, T, H = x.shape
    O = weight.shape[0]

    shift = vec[0]                                   # (B, 1, H)
    scale = vec[1]                                   # (B, 1, H)

    # W^T for the MXU (optionally cast to bf16 for bf16 checkpoints / speed).
    w_t = weight.T                                   # (H, O)
    if mxu_dtype is not None:
        w_t = w_t.astype(mxu_dtype)

    # Fold shift through the matmul (exact):
    #   ((1+s)*xn + shift) @ W^T + b = (1+s)*xn @ W^T + (shift @ W^T + b)
    b_eff = (shift[:, 0, :].astype(jnp.float32)
             @ weight.T.astype(jnp.float32)
             + bias.astype(jnp.float32)).reshape(B, 1, O)    # (B, 1, O) f32

    scale1 = 1.0 + scale                             # (B, 1, H)

    vmem_limit = _vmem_limit_bytes()
    if block_t is None:
        block_t = _pick_block_t(T, H, O, x.dtype.itemsize, vmem_limit)
    tT = block_t if T > block_t else T
    grid = (B, pl.cdiv(T, tT))

    out = pl.pallas_call(
        _last_layer_kernel,
        out_shape=jax.ShapeDtypeStruct((B, T, O), x.dtype),
        grid_spec=pltpu.PrefetchScalarGridSpec(
            num_scalar_prefetch=0,
            grid=grid,
            in_specs=[
                # x: (tT, H) tile per (batch, token-tile) grid point.
                pl.BlockSpec((pl.Squeezed(), tT, H), lambda b, t: (b, t, 0)),
                # 1 + scale: per-batch (1, H), resident across the T axis.
                pl.BlockSpec((pl.Squeezed(), 1, H), lambda b, t: (b, 0, 0)),
                # W^T: constant index_map -> stays resident in VMEM.
                pl.BlockSpec((H, O), lambda b, t: (0, 0)),
                # b_eff = shift @ W^T + bias: per batch, resident across T.
                pl.BlockSpec((pl.Squeezed(), 1, O), lambda b, t: (b, 0, 0)),
            ],
            out_specs=pl.BlockSpec((pl.Squeezed(), tT, O),
                                   lambda b, t: (b, t, 0)),
        ),
        compiler_params=pltpu.CompilerParams(
            dimension_semantics=("parallel", "parallel"),
            vmem_limit_bytes=vmem_limit,
        ),
    )(x, scale1, w_t, b_eff)

    return out


def _reference(x, vec, weight, bias):
    shift = vec[0].squeeze(1)          # (B, H)
    scale = vec[1].squeeze(1)          # (B, H)
    xf = x.astype(jnp.float32)
    mean = jnp.mean(xf, axis=-1, keepdims=True)
    var = jnp.mean((xf - mean) ** 2, axis=-1, keepdims=True)
    xn = (xf - mean) / jnp.sqrt(var + 1e-6)
    mod = (1.0 + scale[:, None, :]) * xn + shift[:, None, :]
    return mod @ weight.T.astype(jnp.float32) + bias.astype(jnp.float32)


if __name__ == "__main__":
    # Small shapes consistent with the module: hidden_size=32, linear out=16.
    B, T, H, O = 2, 8, 32, 16

    key = jax.random.PRNGKey(0)
    k_x, k_s1, k_s2, k_w, k_b = jax.random.split(key, 5)

    x = jax.random.normal(k_x, (B, T, H), dtype=jnp.float32)
    shift = jax.random.normal(k_s1, (B, 1, H), dtype=jnp.float32)
    scale = jax.random.normal(k_s2, (B, 1, H), dtype=jnp.float32)
    vec = jnp.stack([shift, scale], axis=0)                 # (2, B, 1, H)

    # Deterministic synthetic params (torch Linear: weight (O, H), bias (O,))
    weight = jax.random.normal(k_w, (O, H), dtype=jnp.float32) * 0.02
    bias = jax.random.normal(k_b, (O,), dtype=jnp.float32) * 0.01

    ref = _reference(x, vec, weight, bias)

    # Default path: native (f32) weights fed to the MXU.
    out = jax.block_until_ready(last_layer_forward(x, vec, weight, bias))
    assert out.shape == (B, T, O)
    assert jnp.allclose(out, ref, atol=2e-4, rtol=2e-4), "mismatch (f32 path)"

    # Optional bf16 MXU-feed path (what a bf16 checkpoint / fast path uses).
    out_bf16 = jax.block_until_ready(
        last_layer_forward(x, vec, weight, bias, mxu_dtype=jnp.bfloat16))
    assert jnp.allclose(out_bf16, ref, atol=3e-2, rtol=3e-2), "mismatch (bf16 path)"

    print("KERNEL_OK")
</pallas_src>

<mosaic_0001>
module attributes {stable_mosaic.version = 11 : i64} {
  func.func @_last_layer_kernel(%arg0: i32, %arg1: i32, %arg2: memref<1x8x32xf32, #tpu.memory_space<vmem>>, %arg3: memref<1x1x32xf32, #tpu.memory_space<vmem>>, %arg4: memref<32x16xf32, #tpu.memory_space<vmem>>, %arg5: memref<1x1x16xf32, #tpu.memory_space<vmem>>, %arg6: memref<1x8x16xf32, #tpu.memory_space<vmem>>) attributes {dimension_semantics = [#tpu.dimension_semantics<parallel>, #tpu.dimension_semantics<parallel>], iteration_bounds = array<i64: 2, 1>, scalar_prefetch = 0 : i64, scratch_operands = 0 : i64, tpu.core_type = #tpu.core_type<tc>, window_params = [{transform_indices = @transform_0, window_bounds = array<i64: 1, 8, 32>}, {transform_indices = @transform_1, window_bounds = array<i64: 1, 1, 32>}, {pipeline_mode = #tpu.pipeline_mode<synchronous>, transform_indices = @transform_2, window_bounds = array<i64: 32, 16>}, {transform_indices = @transform_3, window_bounds = array<i64: 1, 1, 16>}, {transform_indices = @transform_4, window_bounds = array<i64: 1, 8, 16>}]} {
    %c0 = arith.constant 0 : index
    %c0_0 = arith.constant 0 : index
    %c0_1 = arith.constant 0 : index
    %0 = vector.load %arg2[%c0, %c0_0, %c0_1] : memref<1x8x32xf32, #tpu.memory_space<vmem>>, vector<1x8x32xf32>
    %1 = vector.shape_cast %0 : vector<1x8x32xf32> to vector<8x32xf32>
    %cst = arith.constant dense<0.000000e+00> : vector<8xf32>
    %2 = vector.multi_reduction <add>, %1, %cst [1] : vector<8x32xf32> to vector<8xf32>
    %3 = vector.shape_cast %2 : vector<8xf32> to vector<8x1xf32>
    %cst_2 = arith.constant 3.200000e+01 : f32
    %4 = vector.broadcast %cst_2 : f32 to vector<8x1xf32>
    %5 = arith.divf %3, %4 : vector<8x1xf32>
    %6 = arith.mulf %1, %1 : vector<8x32xf32>
    %cst_3 = arith.constant dense<0.000000e+00> : vector<8xf32>
    %7 = vector.multi_reduction <add>, %6, %cst_3 [1] : vector<8x32xf32> to vector<8xf32>
    %8 = vector.shape_cast %7 : vector<8xf32> to vector<8x1xf32>
    %cst_4 = arith.constant 3.200000e+01 : f32
    %9 = vector.broadcast %cst_4 : f32 to vector<8x1xf32>
    %10 = arith.divf %8, %9 : vector<8x1xf32>
    %11 = arith.mulf %5, %5 : vector<8x1xf32>
    %12 = arith.subf %10, %11 : vector<8x1xf32>
    %cst_5 = arith.constant 0.000000e+00 : f32
    %13 = vector.broadcast %cst_5 : f32 to vector<8x1xf32>
    %14 = arith.maximumf %12, %13 : vector<8x1xf32>
    %cst_6 = arith.constant 9.99999997E-7 : f32
    %15 = vector.broadcast %cst_6 : f32 to vector<8x1xf32>
    %16 = arith.addf %14, %15 : vector<8x1xf32>
    %17 = math.rsqrt %16 : vector<8x1xf32>
    %c0_7 = arith.constant 0 : index
    %c0_8 = arith.constant 0 : index
    %c0_9 = arith.constant 0 : index
    %18 = vector.load %arg3[%c0_7, %c0_8, %c0_9] : memref<1x1x32xf32, #tpu.memory_space<vmem>>, vector<1x1x32xf32>
    %19 = vector.shape_cast %18 : vector<1x1x32xf32> to vector<1x32xf32>
    %20 = vector.broadcast %5 : vector<8x1xf32> to vector<8x32xf32>
    %21 = arith.subf %1, %20 : vector<8x32xf32>
    %22 = vector.broadcast %17 : vector<8x1xf32> to vector<8x32xf32>
    %23 = vector.broadcast %19 : vector<1x32xf32> to vector<8x32xf32>
    %24 = arith.mulf %22, %23 : vector<8x32xf32>
    %25 = arith.mulf %21, %24 : vector<8x32xf32>
    %c0_10 = arith.constant 0 : index
    %c0_11 = arith.constant 0 : index
    %26 = vector.load %arg4[%c0_10, %c0_11] : memref<32x16xf32, #tpu.memory_space<vmem>>, vector<32x16xf32>
    %cst_12 = arith.constant dense<0.000000e+00> : vector<8x16xf32>
    %27 = tpu.matmul %25, %26, %cst_12 {dimension_numbers = #tpu.dot_dimension_numbers<[1], [0], [0], [1], [0, 0, 1, 1], [], []>} : vector<8x32xf32>, vector<32x16xf32>, vector<8x16xf32> -> vector<8x16xf32>
    %c0_13 = arith.constant 0 : index
    %c0_14 = arith.constant 0 : index
    %c0_15 = arith.constant 0 : index
    %28 = vector.load %arg5[%c0_13, %c0_14, %c0_15] : memref<1x1x16xf32, #tpu.memory_space<vmem>>, vector<1x1x16xf32>
    %29 = vector.shape_cast %28 : vector<1x1x16xf32> to vector<1x16xf32>
    %30 = vector.broadcast %29 : vector<1x16xf32> to vector<8x16xf32>
    %31 = arith.addf %27, %30 : vector<8x16xf32>
    %c0_16 = arith.constant 0 : index
    %c0_17 = arith.constant 0 : index
    %c0_18 = arith.constant 0 : index
    %32 = vector.load %arg6[%c0_16, %c0_17, %c0_18] : memref<1x8x16xf32, #tpu.memory_space<vmem>>, vector<1x8x16xf32>
    %33 = vector.shape_cast %32 : vector<1x8x16xf32> to vector<8x16xf32>
    %34 = vector.shape_cast %31 : vector<8x16xf32> to vector<1x8x16xf32>
    tpu.vector_store %arg6[%c0_16, %c0_17, %c0_18], %34 {strides = array<i32>} : memref<1x8x16xf32, #tpu.memory_space<vmem>>, vector<1x8x16xf32>,
    return
  }
  func.func @transform_0(%arg0: i32, %arg1: i32) -> (i32, i32, i32) {
    %c0_i32 = arith.constant 0 : i32
    %c0_i32_0 = arith.constant 0 : i32
    return %arg0, %arg1, %c0_i32 : i32, i32, i32
  }
  func.func @transform_1(%arg0: i32, %arg1: i32) -> (i32, i32, i32) {
    %c0_i32 = arith.constant 0 : i32
    %c0_i32_0 = arith.constant 0 : i32
    %c0_i32_1 = arith.constant 0 : i32
    return %arg0, %c0_i32, %c0_i32_0 : i32, i32, i32
  }
  func.func @transform_2(%arg0: i32, %arg1: i32) -> (i32, i32) {
    %c0_i32 = arith.constant 0 : i32
    %c0_i32_0 = arith.constant 0 : i32
    %c0_i32_1 = arith.constant 0 : i32
    return %c0_i32, %c0_i32_0 : i32, i32
  }
  func.func @transform_3(%arg0: i32, %arg1: i32) -> (i32, i32, i32) {
    %c0_i32 = arith.constant 0 : i32
    %c0_i32_0 = arith.constant 0 : i32
    %c0_i32_1 = arith.constant 0 : i32
    return %arg0, %c0_i32, %c0_i32_0 : i32, i32, i32
  }
  func.func @transform_4(%arg0: i32, %arg1: i32) -> (i32, i32, i32) {
    %c0_i32 = arith.constant 0 : i32
    %c0_i32_0 = arith.constant 0 : i32
    return %arg0, %arg1, %c0_i32 : i32, i32, i32
  }
}

</mosaic_0001>

<llo_original>
// kernel: tpu_custom_call.1
$region0: #{tpu_custom_call.1}
  #allocation0 [shape = 'u32[]', space=smem, size = 0x4, offset = 0x4, fixed_abs, tag = 'smem constant byte address 0x4 - core index']
  #allocation1 [shape = 'u32[144,128]{1,0:T(1,128)}', space=vmem, size = 0x12000, scoped, tag = 'internal scratch']
  %s0 = inlined_call_operand.vmem [shape: f32[2,8,32], index: 0, kind: input, shape index: {}]
  %s1 = inlined_call_operand.vmem [shape: f32[2,1,32], index: 1, kind: input, shape index: {}]
  %s2 = inlined_call_operand.vmem [shape: f32[32,16], index: 2, kind: input, shape index: {}]
  %s3 = inlined_call_operand.vmem [shape: f32[2,1,16], index: 3, kind: input, shape index: {}]
  %s4 = inlined_call_operand.hbm [shape: f32[2,8,16], index: 4, kind: output, shape index: {}]
  %s5 = sld [smem:[#allocation0]]
  $region49: #{tpu_custom_call.1} parent=0
    _
  %s7 = ssub.s32 1, %s5
  %s8 = scalar_select 0, %s7, %s5
  $region1: #{tpu_custom_call.1} parent=0
    #allocation2 [shape = 'u8[8192]{0}', space=vmem, size = 0x2000, scoped, tag = 'output window, operand 0']
    #allocation3 [shape = 's32[2]{0}', space=sflag, size = 0x8, scoped, tag = 'scoped memory for tpu_custom_call.1']
    %9 = vsyncpa [#allocation3], 0
    %s10 = scalar_lea.sflag [#allocation3], 1
    %11 = vsyncpa %s10, 0
    loop: start=0, step=1, limit=4
    $region2: #{tpu_custom_call.1} parent=1 // loop_pre_header
      _
    $region3: #{tpu_custom_call.1} parent=1 // loop_header
      %s13 = sphi 0, %s17
      %p14 = scmp.ge.s32.totalorder %s13, 4
      %s20 = sphi 0, %s32
      %s21 = sphi 0, %s28
      %s22 = sphi 0, %s20
      %s23 = sphi 0, %s21
      %s24 = sphi 0, %s22
      %s25 = sphi 0, %s23
      %s37 = sphi 0, %s39
      %s40 = sphi 0, %s37
      %s41 = sphi 0, %s40
      %s57 = sphi 0, %s41
      %s63 = sphi 0, %s65
      %s66 = sphi 0, %s63
      %s67 = sphi 0, %s66
      %s83 = sphi 0, %s67
      %s87 = sphi 0, %s87
      %s89 = sphi 0, %s87
      %s90 = sphi 0, %s89
      %s104 = sphi 0, %s90
      %s110 = sphi 0, %s112
      %s113 = sphi 0, %s110
      %s114 = sphi 0, %s113
      %s130 = sphi 0, %s114
      %s138 = sphi 0, %s140
      %s141 = sphi 0, %s138
      %s142 = sphi 0, %s141
      %s158 = sphi 0, %s142
    $region4: #{tpu_custom_call.1} parent=1 // loop_header_branch
      %16 = sbr.rel (%p14) target = $region8
    $region5: #{tpu_custom_call.1} parent=1 // loop_body
      %s18 = ssub.s32 %s13, 1
      %s19 = ssub.s32 %s13, 2
      %s26 = sadd.s32 1, %s21
      %p27 = scmp.ge.s32.totalorder %s26, 1
      %s28 = scalar_select %p27, 0, %s26
      %s29 = sadd.s32 1, %s20
      %s30 = scalar_select %p27, %s29, %s20
      %p31 = scmp.ge.s32.totalorder %s30, 2
      %s32 = scalar_select %p31, 0, %s30
      %s33 = ssub.s32 %s20, %s32
      %s34 = ssub.s32 %s21, %s28
      %s35 = sor.u32 %s33, %s34
      %p36 = scmp.eq.s32.totalorder %s35, 0
      %s38 = sadd.s32 %s37, 1
      %s39 = scalar_select %p36, %s37, %s38
      %p42 = pneg %p36
      %p43 = scmp.eq.s32.totalorder %s13, 1
      %p44 = por %p42, %p43
      %p45 = scmp.ne.s32.totalorder %s37, %s40
      %p46 = scmp.eq.s32.totalorder %s13, 0
      %p47 = por %p45, %p46
      %p48 = scmp.ne.s32.totalorder %s37, %s40
      %p49 = scmp.eq.s32.totalorder %s18, 1
      %p50 = por %p48, %p49
      %p51 = scmp.ne.s32.totalorder %s40, %s41
      %p52 = scmp.eq.s32.totalorder %s18, 0
      %p53 = por %p51, %p52
      %p54 = scmp.ne.s32.totalorder %s40, %s41
      %p55 = scmp.eq.s32.totalorder %s19, 1
      %p56 = por %p54, %p55
      %p58 = scmp.ne.s32.totalorder %s41, %s57
      %p59 = scmp.eq.s32.totalorder %s19, 0
      %p60 = por %p58, %p59
      %s61 = ssub.s32 %s20, %s32
      %p62 = scmp.eq.s32.totalorder %s61, 0
      %s64 = sadd.s32 %s63, 1
      %s65 = scalar_select %p62, %s63, %s64
      %p68 = pneg %p62
      %p69 = scmp.eq.s32.totalorder %s13, 1
      %p70 = por %p68, %p69
      %p71 = scmp.ne.s32.totalorder %s63, %s66
      %p72 = scmp.eq.s32.totalorder %s13, 0
      %p73 = por %p71, %p72
      %p74 = scmp.ne.s32.totalorder %s63, %s66
      %p75 = scmp.eq.s32.totalorder %s18, 1
      %p76 = por %p74, %p75
      %p77 = scmp.ne.s32.totalorder %s66, %s67
      %p78 = scmp.eq.s32.totalorder %s18, 0
      %p79 = por %p77, %p78
      %p80 = scmp.ne.s32.totalorder %s66, %s67
      %p81 = scmp.eq.s32.totalorder %s19, 1
      %p82 = por %p80, %p81
      %p84 = scmp.ne.s32.totalorder %s67, %s83
      %p85 = scmp.eq.s32.totalorder %s19, 0
      %p86 = por %p84, %p85
      %s88 = sadd.s32 %s87, 1
      %p91 = scmp.eq.s32.totalorder %s13, 1
      %p92 = scmp.ne.s32.totalorder %s87, %s89
      %p93 = scmp.eq.s32.totalorder %s13, 0
      %p94 = por %p92, %p93
      %p95 = scmp.ne.s32.totalorder %s87, %s89
      %p96 = scmp.eq.s32.totalorder %s18, 1
      %p97 = por %p95, %p96
      %p98 = scmp.ne.s32.totalorder %s89, %s90
      %p99 = scmp.eq.s32.totalorder %s18, 0
      %p100 = por %p98, %p99
      %p101 = scmp.ne.s32.totalorder %s89, %s90
      %p102 = scmp.eq.s32.totalorder %s19, 1
      %p103 = por %p101, %p102
      %p105 = scmp.ne.s32.totalorder %s90, %s104
      %p106 = scmp.eq.s32.totalorder %s19, 0
      %p107 = por %p105, %p106
      %s108 = ssub.s32 %s20, %s32
      %p109 = scmp.eq.s32.totalorder %s108, 0
      %s111 = sadd.s32 %s110, 1
      %s112 = scalar_select %p109, %s110, %s111
      %p115 = pneg %p109
      %p116 = scmp.eq.s32.totalorder %s13, 1
      %p117 = por %p115, %p116
      %p118 = scmp.ne.s32.totalorder %s110, %s113
      %p119 = scmp.eq.s32.totalorder %s13, 0
      %p120 = por %p118, %p119
      %p121 = scmp.ne.s32.totalorder %s110, %s113
      %p122 = scmp.eq.s32.totalorder %s18, 1
      %p123 = por %p121, %p122
      %p124 = scmp.ne.s32.totalorder %s113, %s114
      %p125 = scmp.eq.s32.totalorder %s18, 0
      %p126 = por %p124, %p125
      %p127 = scmp.ne.s32.totalorder %s113, %s114
      %p128 = scmp.eq.s32.totalorder %s19, 1
      %p129 = por %p127, %p128
      %p131 = scmp.ne.s32.totalorder %s114, %s130
      %p132 = scmp.eq.s32.totalorder %s19, 0
      %p133 = por %p131, %p132
      %s134 = ssub.s32 %s20, %s32
      %s135 = ssub.s32 %s21, %s28
      %s136 = sor.u32 %s134, %s135
      %p137 = scmp.eq.s32.totalorder %s136, 0
      %s139 = sadd.s32 %s138, 1
      %s140 = scalar_select %p137, %s138, %s139
      %p143 = pneg %p137
      %p144 = scmp.eq.s32.totalorder %s13, 1
      %p145 = por %p143, %p144
      %p146 = scmp.ne.s32.totalorder %s138, %s141
      %p147 = scmp.eq.s32.totalorder %s13, 0
      %p148 = por %p146, %p147
      %p149 = scmp.ne.s32.totalorder %s138, %s141
      %p150 = scmp.eq.s32.totalorder %s18, 1
      %p151 = por %p149, %p150
      %p152 = scmp.ne.s32.totalorder %s141, %s142
      %p153 = scmp.eq.s32.totalorder %s18, 0
      %p154 = por %p152, %p153
      %p155 = scmp.ne.s32.totalorder %s141, %s142
      %p156 = scmp.eq.s32.totalorder %s19, 1
      %p157 = por %p155, %p156
      %p159 = scmp.ne.s32.totalorder %s142, %s158
      %p160 = scmp.eq.s32.totalorder %s19, 0
      %p161 = por %p159, %p160
      %p162 = scmp.le.s32.totalorder 1, %s13
      %p163 = scmp.lt.s32.totalorder %s13, 3
      %p164 = pnand %p162, %p163
      %p165 = pneg %p164
      // Predicated region
      $region9: #{tpu_custom_call.1} parent=5 // pred_check
        _
      $region10: #{tpu_custom_call.1} parent=5 // pred_check_branch
        %167 = sbr.rel (%p164) target = $region12
      $region11: #{tpu_custom_call.1} parent=5 // pred_region
        %s168 = ssub.s32 %s13, 1
        // Predicated region
        $region13: #{tpu_custom_call.1} parent=11 // pred_check
          %p169 = pneg %p100
        $region14: #{tpu_custom_call.1} parent=11 // pred_check_branch
          %171 = sbr.rel (%p169) target = $region16
        $region15: #{tpu_custom_call.1} parent=11 // pred_region
          _
        $region16: #{tpu_custom_call.1} parent=11 // pred_fallthru
          _
      $region12: #{tpu_custom_call.1} parent=5 // pred_fallthru
        _
      %p172 = scmp.lt.s32.totalorder %s13, 2
      // Predicated region
      $region17: #{tpu_custom_call.1} parent=5 // pred_check
        %p173 = pneg %p172
      $region18: #{tpu_custom_call.1} parent=5 // pred_check_branch
        %175 = sbr.rel (%p173) target = $region20
      $region19: #{tpu_custom_call.1} parent=5 // pred_region
        // Predicated region
        $region21: #{tpu_custom_call.1} parent=19 // pred_check
          %p176 = pneg %p47
        $region22: #{tpu_custom_call.1} parent=19 // pred_check_branch
          %178 = sbr.rel (%p176) target = $region24
        $region23: #{tpu_custom_call.1} parent=19 // pred_region
          %p179 = scmp.lt.s32.totalorder %s20, 1
          %s180 = scalar_select %p179, %s20, 1
          %p181 = scmp.lt.s32.totalorder %s21, 0
          %s182 = scalar_select %p181, %s21, 0
          %s183 = sadd.s32 %s182, %s180
          %s184 = smul.addr %s183, 8
          %s185 = scalar_lea.vmem %s0, %s184
        $region24: #{tpu_custom_call.1} parent=19 // pred_fallthru
          _
        // Predicated region
        $region25: #{tpu_custom_call.1} parent=19 // pred_check
          %p186 = pneg %p73
        $region26: #{tpu_custom_call.1} parent=19 // pred_check_branch
          %188 = sbr.rel (%p186) target = $region28
        $region27: #{tpu_custom_call.1} parent=19 // pred_region
          %p189 = scmp.lt.s32.totalorder %s20, 1
          %s190 = scalar_select %p189, %s20, 1
          %s191 = scalar_lea.vmem %s1, %s190
        $region28: #{tpu_custom_call.1} parent=19 // pred_fallthru
          _
        // Predicated region
        $region29: #{tpu_custom_call.1} parent=19 // pred_check
          %p192 = pneg %p120
        $region30: #{tpu_custom_call.1} parent=19 // pred_check_branch
          %194 = sbr.rel (%p192) target = $region32
        $region31: #{tpu_custom_call.1} parent=19 // pred_region
          %p195 = scmp.lt.s32.totalorder %s20, 1
          %s196 = scalar_select %p195, %s20, 1
          %s197 = scalar_lea.vmem %s3, %s196
        $region32: #{tpu_custom_call.1} parent=19 // pred_fallthru
          _
      $region20: #{tpu_custom_call.1} parent=5 // pred_fallthru
        _
      %p198 = scmp.le.s32.totalorder 1, %s13
      %p199 = scmp.lt.s32.totalorder %s13, 3
      %p200 = pnand %p198, %p199
      %p201 = pneg %p200
      // Predicated region
      $region33: #{tpu_custom_call.1} parent=5 // pred_check
        _
      $region34: #{tpu_custom_call.1} parent=5 // pred_check_branch
        %203 = sbr.rel (%p200) target = $region36
      $region35: #{tpu_custom_call.1} parent=5 // pred_region
        %s204 = ssub.s32 %s13, 1
        %p205 = scmp.lt.s32.totalorder %s22, 1
        %s206 = scalar_select %p205, %s22, 1
        %p207 = scmp.lt.s32.totalorder %s23, 0
        %s208 = scalar_select %p207, %s23, 0
        %s209 = sadd.s32 %s208, %s206
        %s210 = smul.addr %s209, 8
        %s211 = scalar_lea.vmem %s0, %s210
        %p212 = pneg %p53
        %p213 = pneg %p50
        %p214 = scmp.lt.s32.totalorder %s22, 1
        %s215 = scalar_select %p214, %s22, 1
        %s216 = scalar_lea.vmem %s1, %s215
        %p217 = pneg %p79
        %p218 = pneg %p76
        %p219 = pneg %p100
        %p220 = pneg %p97
        %p221 = scmp.lt.s32.totalorder %s22, 1
        %s222 = scalar_select %p221, %s22, 1
        %s223 = scalar_lea.vmem %s3, %s222
        %p224 = pneg %p126
        %p225 = pneg %p123
        %p226 = pneg %p154
        %p227 = pneg %p151
        %s228 = sand.u32 %s141, 1
        %s229 = scalar_lea.sflag [#allocation3], %s228
        %s230 = sand.u32 %s141, 1
        %s231 = smul.addr %s230, 8
        %s232 = scalar_lea.vmem [#allocation2], %s231
        %p233 = scmp.lt.s32.totalorder %s22, 1
        %s234 = scalar_select %p233, %s22, 1
        %p235 = scmp.lt.s32.totalorder %s23, 0
        %s236 = scalar_select %p235, %s23, 0
        %s237 = sadd.s32 %s236, %s234
        %s238 = smul.addr %s237, 8
        %s239 = scalar_lea.vmem %s0, %s238
        %p240 = scmp.lt.s32.totalorder %s22, 1
        %s241 = scalar_select %p240, %s22, 1
        %s242 = scalar_lea.vmem %s1, %s241
        %p243 = scmp.lt.s32.totalorder %s22, 1
        %s244 = scalar_select %p243, %s22, 1
        %s245 = scalar_lea.vmem %s3, %s244
        %v246 = vld [vmem:[%s239] sm:$0xff]
        %vm247 = vcmask 261120
        %v248 = vsel %vm247, %v246, 0.0
        %249 = vadd.xlane.f32.xlu0 %v248
        %v250 = vpop.xlane.xlu0 %249
        %v251 = vrcp.pop 32.0
        %v252 = vmul.f32 %v250, %v251
        %v253 = vmul.f32 %v246, %v246
        %v254 = vsel %vm247, %v253, 0.0
        %255 = vadd.xlane.f32.xlu0 %v254
        %v256 = vpop.xlane.xlu0 %255
        %v257 = vmul.f32 %v256, %v251
        %v258 = vmul.f32 %v252, %v252
        %v259 = vsub.f32 %v257, %v258
        %v260 = vmax.f32 %v259, 0.0
        %v261 = vadd.f32 %v260, 1e-06
        %v262 = vrsqrt.pop %v261
        %v263 = vld [vmem:[%s242] sm:$0x1]
        %v264 = vsub.f32 %v246, %v252
        %v266 = vlaneseq
        %v267 = vshrl.u32 %v266, 7
        %v268 = vsub.s32 0, %v267
        %v269 = vrot.slane %v263, %v268
        %v271 = vmul.f32 %v262, %v269
        %v272 = vmul.f32 %v264, %v271
        %v273 = vld [vmem:[%s2] sm:$0xff]
        %v274 = vld [vmem:[%s2 + $0x8] sm:$0xff]
        %v275 = vld [vmem:[%s2 + $0x10] sm:$0xff]
        %v276 = vld [vmem:[%s2 + $0x18] sm:$0xff]
        %v277 = vld [vmem:[%s245] sm:$0x1]
        %v279 = vlaneseq
        %v280 = vshrl.u32 %v279, 7
        %v281 = vsub.s32 0, %v280
        %v282 = vrot.slane %v277, %v281
        %v285 = vsel %vm247, %v272, 0
        %287 = vmatprep.subr.mxu0 0.0
        %288 = vmatpush1.msra.mxu0 %v273
        %289 = vmatprep.subr.mxu0 0.0
        %290 = vmatpush1.msra.mxu0 %v274
        %291 = vmatprep.subr.mxu0 0.0
        %292 = vmatpush1.msra.mxu0 %v275
        %293 = vmatprep.subr.mxu0 0.0
        %294 = vmatpush1.msra.mxu0 %v276
        %295 = vmatprep.subr.mxu0 0.0
        %296 = vmatpush1.msra.mxu0 0.0
        %297 = vmatprep.subr.mxu0 0.0
        %298 = vmatpush1.msra.mxu0 0.0
        %299 = vmatprep.subr.mxu0 0.0
        %300 = vmatpush1.msra.mxu0 0.0
        %301 = vmatprep.subr.mxu0 0.0
        %302 = vmatpush1.msra.mxu0 0.0
        %303 = vmatprep.subr.mxu0 0.0
        %304 = vmatpush1.msra.mxu0 0.0
        %305 = vmatprep.subr.mxu0 0.0
        %306 = vmatpush1.msra.mxu0 0.0
        %307 = vmatprep.subr.mxu0 0.0
        %308 = vmatpush1.msra.mxu0 0.0
        %309 = vmatprep.subr.mxu0 0.0
        %310 = vmatpush1.msra.mxu0 0.0
        %311 = vmatprep.subr.mxu0 0.0
        %312 = vmatpush1.msra.mxu0 0.0
        %313 = vmatprep.subr.mxu0 0.0
        %314 = vmatpush1.msra.mxu0 0.0
        %315 = vmatprep.subr.mxu0 0.0
        %316 = vmatpush1.msra.mxu0 0.0
        %317 = vmatprep.subr.mxu0 0.0
        %318 = vmatpush1.msra.mxu0 0.0
        %319 = vmatprep.subr.mxu0 0.0
        %320 = vmatpush1.msra.mxu0 0.0
        %321 = vmatprep.subr.mxu0 0.0
        %322 = vmatpush1.msra.mxu0 0.0
        %323 = vmatprep.subr.mxu0 0.0
        %324 = vmatpush1.msra.mxu0 0.0
        %325 = vmatprep.subr.mxu0 0.0
        %326 = vmatpush1.msra.mxu0 0.0
        %327 = vmatprep.subr.mxu0 0.0
        %328 = vmatpush1.msra.mxu0 0.0
        %329 = vmatprep.subr.mxu0 0.0
        %330 = vmatpush1.msra.mxu0 0.0
        %331 = vmatprep.subr.mxu0 0.0
        %332 = vmatpush1.msra.mxu0 0.0
        %333 = vmatprep.subr.mxu0 0.0
        %334 = vmatpush1.msra.mxu0 0.0
        %335 = vmatprep.subr.mxu0 0.0
        %336 = vmatpush1.msra.mxu0 0.0
        %337 = vmatprep.subr.mxu0 0.0
        %338 = vmatpush1.msra.mxu0 0.0
        %339 = vmatprep.subr.mxu0 0.0
        %340 = vmatpush1.msra.mxu0 0.0
        %341 = vmatprep.subr.mxu0 0.0
        %342 = vmatpush1.msra.mxu0 0.0
        %343 = vmatprep.subr.mxu0 0.0
        %344 = vmatpush1.msra.mxu0 0.0
        %345 = vmatprep.subr.mxu0 0.0
        %346 = vmatpush1.msra.mxu0 0.0
        %347 = vmatprep.subr.mxu0 0.0
        %348 = vmatpush1.msra.mxu0 0.0
        %349 = vmatprep.subr.mxu0 0.0
        %350 = vmatpush1.msra.mxu0 0.0
        %351 = vmatprep.mubr.f32.mxu0 0.0
        %352 = vmatmul.mubr.f32.gmra.mrb[0].mxu0 %v285
        %v353 = vpop.f32.mrb[0].mxu0
        %v354 = vadd.f32 %v282, %v353
        %v355 = vpop.f32.mrb[0].mxu0
        %356 = vdwg.mxu0
        %vm357 = vcmask 130048
        %358 = vst.msk [vmem:[%s232] sm:$0xff] %vm357, %v354
        %s359 = sand.u32 %s141, 1
        %s360 = scalar_lea.sflag [#allocation3], %s359
        %s361 = sand.u32 %s141, 1
        %s362 = smul.addr %s361, 8
        %s363 = scalar_lea.vmem [#allocation2], %s362
        // Predicated region
        $region37: #{tpu_custom_call.1} parent=35 // pred_check
          %p364 = pneg %p151
        $region38: #{tpu_custom_call.1} parent=35 // pred_check_branch
          %366 = sbr.rel (%p364) target = $region40
        $region39: #{tpu_custom_call.1} parent=35 // pred_region
          %s368 = ssub.s32 128, 128
          %369 = vsyncadd %s360, %s368
          %s370 = sadd.s32 %s23, %s22
          %s371 = smul.addr %s370, 128
          %s372 = scalar_lea.hbm %s4, %s371
          %s374 = sshll.u32 %s363, 4
          %s375 = int_to_ptr.vmem [resolvable:$true] %s374
          %377 = dma.vmem_to_hbm [thread:$0]  %s375, 128, %s372, %s360
        $region40: #{tpu_custom_call.1} parent=35 // pred_fallthru
          _
      $region36: #{tpu_custom_call.1} parent=5 // pred_fallthru
        _
      %p378 = scmp.le.s32.totalorder 2, %s13
      // Predicated region
      $region41: #{tpu_custom_call.1} parent=5 // pred_check
        %p379 = pneg %p378
      $region42: #{tpu_custom_call.1} parent=5 // pred_check_branch
        %381 = sbr.rel (%p379) target = $region44
      $region43: #{tpu_custom_call.1} parent=5 // pred_region
        %s382 = ssub.s32 %s13, 2
        // Predicated region
        $region45: #{tpu_custom_call.1} parent=43 // pred_check
          %p383 = pneg %p157
        $region46: #{tpu_custom_call.1} parent=43 // pred_check_branch
          %385 = sbr.rel (%p383) target = $region48
        $region47: #{tpu_custom_call.1} parent=43 // pred_region
          %s386 = sand.u32 %s142, 1
          %s387 = scalar_lea.sflag [#allocation3], %s386
          %s388 = sand.u32 %s142, 1
          %s389 = smul.addr %s388, 8
          %s390 = scalar_lea.vmem [#allocation2], %s389
          %391 = dma.done %s387, 128
        $region48: #{tpu_custom_call.1} parent=43 // pred_fallthru
          _
      $region44: #{tpu_custom_call.1} parent=5 // pred_fallthru
        _
    $region6: #{tpu_custom_call.1} parent=1 // loop_footer
      %s17 = sadd.s32 1, %s13
    $region7: #{tpu_custom_call.1} parent=1 // loop_footer_branch
      %12 = sbr.rel target = $region3
    $region8: #{tpu_custom_call.1} parent=1 // loop_exit
      _
    %392 = vsyncpa [#allocation3], 1
    %s393 = scalar_lea.sflag [#allocation3], 1
    %394 = vsyncpa %s393, 1

</llo_original>
